<compile_context>
chip_gen: v5e
topology: v5e:2x2
jax: 0.10.0
libtpu: 0.0.40
codegen_flags: <defaults>
</compile_context>

<pallas_src>
import jax
import jax.numpy as jnp
from jax.experimental import pallas as pl
from jax.experimental.pallas import tpu as pltpu


def _silu(v):
    return v * jax.nn.sigmoid(v)


def _round_up(v, m):
    return ((v + m - 1) // m) * m


def _pick_tile(dim, candidates):
    for c in candidates:
        if dim % c == 0:
            return c
    return dim


def wise_proj_kernel(x_ref, w_ref, out_ref, l2_ref,
                     acc_o, acc_l, acc_n, ss1, ss2):
    """Grid = (i: token tiles [parallel], j: output tiles, k: hidden reduction)."""
    j = pl.program_id(1)
    k = pl.program_id(2)
    nj = pl.num_programs(1)
    nk = pl.num_programs(2)

    @pl.when(k == 0)
    def _():
        acc_o[...] = jnp.zeros_like(acc_o)
        acc_l[...] = jnp.zeros_like(acc_l)
        acc_n[...] = jnp.zeros_like(acc_n)

    @pl.when(jnp.logical_and(j == 0, k == 0))
    def _():
        ss1[...] = jnp.zeros_like(ss1)
        ss2[...] = jnp.zeros_like(ss2)

    # Weights were pre-transposed to (H, O) in the wrapper: natural (M,K)x(K,N)
    # MXU layout, operands kept in their input dtype (bf16 fast path), f32 accumulate.
    x = x_ref[...]
    dn = (((1,), (0,)), ((), ()))
    acc_o[...] += jax.lax.dot_general(x, w_ref[0], dn, preferred_element_type=jnp.float32)
    acc_l[...] += jax.lax.dot_general(x, w_ref[1], dn, preferred_element_type=jnp.float32)
    acc_n[...] += jax.lax.dot_general(x, w_ref[2], dn, preferred_element_type=jnp.float32)

    @pl.when(k == nk - 1)
    def _():
        o = acc_o[...]
        lay = acc_l[...]
        new = acc_n[...]
        so = _silu(o)                       # f32 epilogue (v5e has no bf16 VPU/EUP)
        d1 = _silu(lay) - so
        d2 = _silu(new) - so
        ss1[...] += jnp.sum(d1 * d1, axis=-1, keepdims=True)
        ss2[...] += jnp.sum(d2 * d2, axis=-1, keepdims=True)
        out_ref[0] = o.astype(out_ref.dtype)
        out_ref[1] = lay.astype(out_ref.dtype)
        out_ref[2] = new.astype(out_ref.dtype)

    @pl.when(jnp.logical_and(j == nj - 1, k == nk - 1))
    def _():
        # Per-token L2 norms packed into a lane-dense (tm, 128) tile:
        # lane 0 -> ||silu(layer)-silu(orig)||, lane 1 -> ||silu(new)-silu(orig)||.
        lane = jax.lax.broadcasted_iota(jnp.int32, l2_ref.shape, 1)
        l2_1 = jnp.sqrt(ss1[...])
        l2_2 = jnp.sqrt(ss2[...])
        l2_ref[...] = jnp.where(lane == 0, l2_1, jnp.where(lane == 1, l2_2, 0.0))


def wise_select_kernel(sel_ref, src_ref, out_ref):
    # sel_ref is consumed by the index_map (scalar prefetch): only the selected
    # slab (original / layer / new) is ever DMA'd from HBM.
    del sel_ref
    out_ref[...] = src_ref[0]


def wise_adapter_forward(x, w_original, w_layer, w_new, threshold, *, compute_dtype=None):
    """x: (B, S, H) with B == 1 (the PyTorch module calls dist.item()); weights (O, H).

    Returns (layer_out (B, S, O), dist1, dist2)."""
    B, S, H = x.shape
    if B != 1:
        raise ValueError("WISEAdapter routing uses a single scalar distance; B must be 1.")
    O = w_original.shape[0]
    out_dtype = x.dtype
    cdt = jnp.dtype(compute_dtype) if compute_dtype is not None else x.dtype

    N = B * S
    if N <= 256:
        n_pad = _round_up(N, 8)
        tm = n_pad
    else:
        n_pad = _round_up(N, 256)
        tm = 256
    h_pad = _round_up(H, 128)
    o_pad = _round_up(O, 128)
    tk = _pick_tile(h_pad, (512, 256, 128))
    tn = _pick_tile(o_pad, (512, 256, 128))

    # Zero padding is distance-safe: padded hidden columns contribute 0 to the matmul,
    # padded output lanes give silu(0)-silu(0)=0 in the L2, padded token rows are
    # sliced off before the token mean.
    x2d = jnp.pad(x.reshape(N, H).astype(cdt), ((0, n_pad - N), (0, h_pad - H)))
    w_all = jnp.stack([w_original.T, w_layer.T, w_new.T]).astype(cdt)      # (3, H, O)
    w_all = jnp.pad(w_all, ((0, 0), (0, h_pad - H), (0, o_pad - O)))

    grid = (n_pad // tm, o_pad // tn, h_pad // tk)
    elt = jnp.dtype(cdt).itemsize
    cost = pl.CostEstimate(
        flops=2 * 3 * n_pad * h_pad * o_pad,
        transcendentals=3 * n_pad * o_pad + 2 * n_pad,
        bytes_accessed=(n_pad * h_pad * elt + 3 * h_pad * o_pad * elt
                        + 3 * n_pad * o_pad * jnp.dtype(out_dtype).itemsize
                        + n_pad * 128 * 4),
    )

    out3, l2 = pl.pallas_call(
        wise_proj_kernel,
        grid_spec=pltpu.PrefetchScalarGridSpec(
            num_scalar_prefetch=0,
            grid=grid,
            in_specs=[
                pl.BlockSpec((tm, tk), lambda i, j, k: (i, k)),          # x tile
                pl.BlockSpec((3, tk, tn), lambda i, j, k: (0, k, j)),    # stacked weights
            ],
            out_specs=[
                pl.BlockSpec((3, tm, tn), lambda i, j, k: (0, i, j)),    # orig/layer/new
                pl.BlockSpec((tm, 128), lambda i, j, k: (i, 0)),         # per-token L2s
            ],
            scratch_shapes=[
                pltpu.VMEM((tm, tn), jnp.float32),   # acc original
                pltpu.VMEM((tm, tn), jnp.float32),   # acc layer
                pltpu.VMEM((tm, tn), jnp.float32),   # acc new
                pltpu.VMEM((tm, 1), jnp.float32),    # sum-of-squares (layer vs orig)
                pltpu.VMEM((tm, 1), jnp.float32),    # sum-of-squares (new vs orig)
            ],
        ),
        out_shape=(
            jax.ShapeDtypeStruct((3, n_pad, o_pad), out_dtype),
            jax.ShapeDtypeStruct((n_pad, 128), jnp.float32),
        ),
        compiler_params=pltpu.CompilerParams(
            dimension_semantics=("parallel", "arbitrary", "arbitrary"),
            vmem_limit_bytes=48 * 1024 * 1024,
        ),
        cost_estimate=cost,
    )(x2d, w_all)

    # euc(): per-token L2, then mean over tokens (seq <= 100) or max-over-seq (infer path).
    l2_1 = l2[:N, 0].reshape(B, S)
    l2_2 = l2[:N, 1].reshape(B, S)
    if S > 100:
        dist1 = jnp.mean(jnp.max(l2_1, axis=1))
        dist2 = jnp.mean(jnp.max(l2_2, axis=1))
    else:
        dist1 = jnp.mean(l2_1, axis=1)[0]
        dist2 = jnp.mean(l2_2, axis=1)[0]

    thr = jnp.asarray(threshold, jnp.float32)
    use_orig = jnp.logical_and(dist1 < thr, dist2 < thr)
    sel = jnp.where(use_orig, 0, jnp.where(dist1 > dist2, 1, 2)).astype(jnp.int32)

    out_pad = pl.pallas_call(
        wise_select_kernel,
        grid_spec=pltpu.PrefetchScalarGridSpec(
            num_scalar_prefetch=1,
            grid=(n_pad // tm, o_pad // tn),
            in_specs=[pl.BlockSpec((1, tm, tn), lambda i, j, s: (s[0], i, j))],
            out_specs=pl.BlockSpec((tm, tn), lambda i, j, s: (i, j)),
        ),
        out_shape=jax.ShapeDtypeStruct((n_pad, o_pad), out_dtype),
        compiler_params=pltpu.CompilerParams(
            dimension_semantics=("parallel", "parallel")),
    )(jnp.reshape(sel, (1,)), out3)

    out = out_pad[:N, :O].reshape(B, S, O)
    return out, dist1, dist2


def wise_adapter_reference(x, w_original, w_layer, w_new, threshold):
    """Pure-JAX reference mirroring the PyTorch non-retrieve forward branch."""
    hp = jax.lax.Precision.HIGHEST
    f32 = jnp.float32
    orig = jnp.einsum('bsh,oh->bso', x, w_original, precision=hp, preferred_element_type=f32)
    lay = jnp.einsum('bsh,oh->bso', x, w_layer, precision=hp, preferred_element_type=f32)
    new = jnp.einsum('bsh,oh->bso', x, w_new, precision=hp, preferred_element_type=f32)

    def euc(q, k):
        l2 = jnp.linalg.norm(_silu(k) - _silu(q), axis=-1)     # (B, S)
        if l2.shape[1] > 100:
            return jnp.mean(jnp.max(l2, axis=1))
        return jnp.mean(l2, axis=-1)[0]

    d2 = euc(orig, new)
    d1 = euc(orig, lay)
    use_orig = jnp.logical_and(d1 < threshold, d2 < threshold)
    sel = jnp.where(use_orig, 0, jnp.where(d1 > d2, 1, 2))
    out = jnp.where(use_orig, orig, jnp.where(d1 > d2, lay, new)).astype(x.dtype)
    return out, d1, d2, sel


if __name__ == "__main__":
    # TODO(synk): merge_weight (slerp/TIES/DARE), numpy-RNG mask generation, the
    # editing/training branch and the retrieve-mode Python loop over memory_weight
    # have no in-kernel equivalent; only the inference non-retrieve forward
    # (routing between original / layer / new weights) is implemented.
    key = jax.random.PRNGKey(0)
    k_x, k_w, k_dl, k_dn = jax.random.split(key, 4)

    B, S, H, O = 1, 8, 256, 256   # batch=1 (module calls dist.item()), seq=8 (<=100 path)
    x = jax.random.normal(k_x, (B, S, H), dtype=jnp.float32)
    w_original = 0.1 * jax.random.normal(k_w, (O, H), dtype=jnp.float32)
    w_layer = w_original + 0.05 * jax.random.normal(k_dl, (O, H), dtype=jnp.float32)
    w_new = w_original + 0.02 * jax.random.normal(k_dn, (O, H), dtype=jnp.float32)

    # threshold = editing_mean_act.min_act() * config.act_ratio (synthetic: 1.0 * 0.88)
    threshold = 1.0 * 0.88

    # --- f32 path ------------------------------------------------------------
    out, d1, d2 = wise_adapter_forward(x, w_original, w_layer, w_new, threshold)
    jax.block_until_ready(out)
    ref_out, rd1, rd2, rsel = wise_adapter_reference(x, w_original, w_layer, w_new, threshold)

    assert jnp.allclose(d1, rd1, rtol=2e-2, atol=2e-2), (float(d1), float(rd1))
    assert jnp.allclose(d2, rd2, rtol=2e-2, atol=2e-2), (float(d2), float(rd2))
    assert jnp.allclose(out, ref_out, rtol=2e-2, atol=3e-2)
    ksel = jnp.where(jnp.logical_and(d1 < threshold, d2 < threshold), 0,
                     jnp.where(d1 > d2, 1, 2))
    assert int(ksel) == int(rsel), (int(ksel), int(rsel))

    # --- routing check: huge threshold -> falls back to the original layer ----
    out_o, _, _ = wise_adapter_forward(x, w_original, w_layer, w_new, 1e9)
    orig_ref = jnp.einsum('bsh,oh->bso', x, w_original,
                          precision=jax.lax.Precision.HIGHEST)
    assert jnp.allclose(out_o, orig_ref, rtol=2e-2, atol=3e-2)

    # --- bf16 fast path (MXU-native operands, f32 accumulation) ---------------
    xb = x.astype(jnp.bfloat16)
    wob = w_original.astype(jnp.bfloat16)
    wlb = w_layer.astype(jnp.bfloat16)
    wnb = w_new.astype(jnp.bfloat16)
    out_b, d1_b, d2_b = wise_adapter_forward(xb, wob, wlb, wnb, threshold)
    jax.block_until_ready(out_b)
    ref_b, rd1_b, rd2_b, _ = wise_adapter_reference(xb, wob, wlb, wnb, threshold)
    assert jnp.allclose(d1_b, rd1_b, rtol=5e-2, atol=5e-2), (float(d1_b), float(rd1_b))
    assert jnp.allclose(d2_b, rd2_b, rtol=5e-2, atol=5e-2), (float(d2_b), float(rd2_b))
    assert jnp.allclose(out_b.astype(jnp.float32), ref_b.astype(jnp.float32),
                        rtol=5e-2, atol=5e-2)

    print("KERNEL_OK")
</pallas_src>

<mosaic_0001>
module attributes {stable_mosaic.version = 11 : i64} {
  func.func @wise_proj_kernel(%arg0: i32, %arg1: i32, %arg2: i32, %arg3: memref<8x256xf32, #tpu.memory_space<vmem>>, %arg4: memref<3x256x256xf32, #tpu.memory_space<vmem>>, %arg5: memref<3x8x256xf32, #tpu.memory_space<vmem>>, %arg6: memref<8x128xf32, #tpu.memory_space<vmem>>, %arg7: memref<8x256xf32, #tpu.memory_space<vmem>>, %arg8: memref<8x256xf32, #tpu.memory_space<vmem>>, %arg9: memref<8x256xf32, #tpu.memory_space<vmem>>, %arg10: memref<8x1xf32, #tpu.memory_space<vmem>>, %arg11: memref<8x1xf32, #tpu.memory_space<vmem>>) attributes {dimension_semantics = [#tpu.dimension_semantics<parallel>, #tpu.dimension_semantics<arbitrary>, #tpu.dimension_semantics<arbitrary>], iteration_bounds = array<i64: 1, 1, 1>, scalar_prefetch = 0 : i64, scratch_operands = 5 : i64, tpu.core_type = #tpu.core_type<tc>, window_params = [{transform_indices = @transform_0, window_bounds = array<i64: 8, 256>}, {transform_indices = @transform_1, window_bounds = array<i64: 3, 256, 256>}, {transform_indices = @transform_2, window_bounds = array<i64: 3, 8, 256>}, {transform_indices = @transform_3, window_bounds = array<i64: 8, 128>}]} {
    %c0_i32 = arith.constant 0 : i32
    %0 = arith.cmpi eq, %arg2, %c0_i32 : i32
    %1 = arith.extui %0 : i1 to i32
    %c0_i32_0 = arith.constant 0 : i32
    %2 = arith.cmpi ne, %1, %c0_i32_0 : i32
    scf.if %2 {
      %cst_31 = arith.constant 0.000000e+00 : f32
      %35 = vector.broadcast %cst_31 : f32 to vector<8x256xf32>
      %c0_32 = arith.constant 0 : index
      %c0_33 = arith.constant 0 : index
      %36 = vector.load %arg7[%c0_32, %c0_33] : memref<8x256xf32, #tpu.memory_space<vmem>>, vector<8x256xf32>
      tpu.vector_store %arg7[%c0_32, %c0_33], %35 {strides = array<i32>} : memref<8x256xf32, #tpu.memory_space<vmem>>, vector<8x256xf32>,
      %cst_34 = arith.constant 0.000000e+00 : f32
      %37 = vector.broadcast %cst_34 : f32 to vector<8x256xf32>
      %c0_35 = arith.constant 0 : index
      %c0_36 = arith.constant 0 : index
      %38 = vector.load %arg8[%c0_35, %c0_36] : memref<8x256xf32, #tpu.memory_space<vmem>>, vector<8x256xf32>
      tpu.vector_store %arg8[%c0_35, %c0_36], %37 {strides = array<i32>} : memref<8x256xf32, #tpu.memory_space<vmem>>, vector<8x256xf32>,
      %cst_37 = arith.constant 0.000000e+00 : f32
      %39 = vector.broadcast %cst_37 : f32 to vector<8x256xf32>
      %c0_38 = arith.constant 0 : index
      %c0_39 = arith.constant 0 : index
      %40 = vector.load %arg9[%c0_38, %c0_39] : memref<8x256xf32, #tpu.memory_space<vmem>>, vector<8x256xf32>
      tpu.vector_store %arg9[%c0_38, %c0_39], %39 {strides = array<i32>} : memref<8x256xf32, #tpu.memory_space<vmem>>, vector<8x256xf32>,
    } else {
    }
    %c0_i32_1 = arith.constant 0 : i32
    %3 = arith.cmpi eq, %arg1, %c0_i32_1 : i32
    %c0_i32_2 = arith.constant 0 : i32
    %4 = arith.cmpi eq, %arg2, %c0_i32_2 : i32
    %5 = arith.andi %3, %4 : i1
    %6 = arith.extui %5 : i1 to i32
    %c0_i32_3 = arith.constant 0 : i32
    %7 = arith.cmpi ne, %6, %c0_i32_3 : i32
    scf.if %7 {
      %cst_31 = arith.constant 0.000000e+00 : f32
      %35 = vector.broadcast %cst_31 : f32 to vector<8x1xf32>
      %c0_32 = arith.constant 0 : index
      %c0_33 = arith.constant 0 : index
      %36 = vector.load %arg10[%c0_32, %c0_33] : memref<8x1xf32, #tpu.memory_space<vmem>>, vector<8x1xf32>
      tpu.vector_store %arg10[%c0_32, %c0_33], %35 {strides = array<i32>} : memref<8x1xf32, #tpu.memory_space<vmem>>, vector<8x1xf32>,
      %cst_34 = arith.constant 0.000000e+00 : f32
      %37 = vector.broadcast %cst_34 : f32 to vector<8x1xf32>
      %c0_35 = arith.constant 0 : index
      %c0_36 = arith.constant 0 : index
      %38 = vector.load %arg11[%c0_35, %c0_36] : memref<8x1xf32, #tpu.memory_space<vmem>>, vector<8x1xf32>
      tpu.vector_store %arg11[%c0_35, %c0_36], %37 {strides = array<i32>} : memref<8x1xf32, #tpu.memory_space<vmem>>, vector<8x1xf32>,
    } else {
    }
    %c0 = arith.constant 0 : index
    %c0_4 = arith.constant 0 : index
    %8 = vector.load %arg3[%c0, %c0_4] : memref<8x256xf32, #tpu.memory_space<vmem>>, vector<8x256xf32>
    %c0_5 = arith.constant 0 : index
    %c0_6 = arith.constant 0 : index
    %9 = vector.load %arg7[%c0_5, %c0_6] : memref<8x256xf32, #tpu.memory_space<vmem>>, vector<8x256xf32>
    %c0_7 = arith.constant 0 : index
    %c0_8 = arith.constant 0 : index
    %c0_9 = arith.constant 0 : index
    %10 = vector.load %arg4[%c0_7, %c0_8, %c0_9] : memref<3x256x256xf32, #tpu.memory_space<vmem>>, vector<1x256x256xf32>
    %11 = vector.shape_cast %10 : vector<1x256x256xf32> to vector<256x256xf32>
    %cst = arith.constant dense<0.000000e+00> : vector<8x256xf32>
    %12 = tpu.matmul %8, %11, %cst {dimension_numbers = #tpu.dot_dimension_numbers<[1], [0], [0], [1], [0, 0, 1, 1], [], []>} : vector<8x256xf32>, vector<256x256xf32>, vector<8x256xf32> -> vector<8x256xf32>
    %13 = arith.addf %9, %12 : vector<8x256xf32>
    %c0_10 = arith.constant 0 : index
    %c0_11 = arith.constant 0 : index
    %14 = vector.load %arg7[%c0_10, %c0_11] : memref<8x256xf32, #tpu.memory_space<vmem>>, vector<8x256xf32>
    tpu.vector_store %arg7[%c0_10, %c0_11], %13 {strides = array<i32>} : memref<8x256xf32, #tpu.memory_space<vmem>>, vector<8x256xf32>,
    %c0_12 = arith.constant 0 : index
    %c0_13 = arith.constant 0 : index
    %15 = vector.load %arg8[%c0_12, %c0_13] : memref<8x256xf32, #tpu.memory_space<vmem>>, vector<8x256xf32>
    %c1 = arith.constant 1 : index
    %c0_14 = arith.constant 0 : index
    %c0_15 = arith.constant 0 : index
    %16 = vector.load %arg4[%c1, %c0_14, %c0_15] : memref<3x256x256xf32, #tpu.memory_space<vmem>>, vector<1x256x256xf32>
    %17 = vector.shape_cast %16 : vector<1x256x256xf32> to vector<256x256xf32>
    %cst_16 = arith.constant dense<0.000000e+00> : vector<8x256xf32>
    %18 = tpu.matmul %8, %17, %cst_16 {dimension_numbers = #tpu.dot_dimension_numbers<[1], [0], [0], [1], [0, 0, 1, 1], [], []>} : vector<8x256xf32>, vector<256x256xf32>, vector<8x256xf32> -> vector<8x256xf32>
    %19 = arith.addf %15, %18 : vector<8x256xf32>
    %c0_17 = arith.constant 0 : index
    %c0_18 = arith.constant 0 : index
    %20 = vector.load %arg8[%c0_17, %c0_18] : memref<8x256xf32, #tpu.memory_space<vmem>>, vector<8x256xf32>
    tpu.vector_store %arg8[%c0_17, %c0_18], %19 {strides = array<i32>} : memref<8x256xf32, #tpu.memory_space<vmem>>, vector<8x256xf32>,
    %c0_19 = arith.constant 0 : index
    %c0_20 = arith.constant 0 : index
    %21 = vector.load %arg9[%c0_19, %c0_20] : memref<8x256xf32, #tpu.memory_space<vmem>>, vector<8x256xf32>
    %c2 = arith.constant 2 : index
    %c0_21 = arith.constant 0 : index
    %c0_22 = arith.constant 0 : index
    %22 = vector.load %arg4[%c2, %c0_21, %c0_22] : memref<3x256x256xf32, #tpu.memory_space<vmem>>, vector<1x256x256xf32>
    %23 = vector.shape_cast %22 : vector<1x256x256xf32> to vector<256x256xf32>
    %cst_23 = arith.constant dense<0.000000e+00> : vector<8x256xf32>
    %24 = tpu.matmul %8, %23, %cst_23 {dimension_numbers = #tpu.dot_dimension_numbers<[1], [0], [0], [1], [0, 0, 1, 1], [], []>} : vector<8x256xf32>, vector<256x256xf32>, vector<8x256xf32> -> vector<8x256xf32>
    %25 = arith.addf %21, %24 : vector<8x256xf32>
    %c0_24 = arith.constant 0 : index
    %c0_25 = arith.constant 0 : index
    %26 = vector.load %arg9[%c0_24, %c0_25] : memref<8x256xf32, #tpu.memory_space<vmem>>, vector<8x256xf32>
    tpu.vector_store %arg9[%c0_24, %c0_25], %25 {strides = array<i32>} : memref<8x256xf32, #tpu.memory_space<vmem>>, vector<8x256xf32>,
    %c0_i32_26 = arith.constant 0 : i32
    %27 = arith.cmpi eq, %arg2, %c0_i32_26 : i32
    %28 = arith.extui %27 : i1 to i32
    %c0_i32_27 = arith.constant 0 : i32
    %29 = arith.cmpi ne, %28, %c0_i32_27 : i32
    scf.if %29 {
      %c0_31 = arith.constant 0 : index
      %c0_32 = arith.constant 0 : index
      %35 = vector.load %arg7[%c0_31, %c0_32] : memref<8x256xf32, #tpu.memory_space<vmem>>, vector<8x256xf32>
      %c0_33 = arith.constant 0 : index
      %c0_34 = arith.constant 0 : index
      %36 = vector.load %arg8[%c0_33, %c0_34] : memref<8x256xf32, #tpu.memory_space<vmem>>, vector<8x256xf32>
      %c0_35 = arith.constant 0 : index
      %c0_36 = arith.constant 0 : index
      %37 = vector.load %arg9[%c0_35, %c0_36] : memref<8x256xf32, #tpu.memory_space<vmem>>, vector<8x256xf32>
      %38 = arith.negf %35 : vector<8x256xf32>
      %39 = math.exp %38 : vector<8x256xf32>
      %cst_37 = arith.constant 1.000000e+00 : f32
      %40 = vector.broadcast %cst_37 : f32 to vector<8x256xf32>
      %41 = arith.addf %40, %39 : vector<8x256xf32>
      %42 = arith.divf %40, %41 : vector<8x256xf32>
      %43 = arith.mulf %35, %42 : vector<8x256xf32>
      %44 = arith.negf %36 : vector<8x256xf32>
      %45 = math.exp %44 : vector<8x256xf32>
      %cst_38 = arith.constant 1.000000e+00 : f32
      %46 = vector.broadcast %cst_38 : f32 to vector<8x256xf32>
      %47 = arith.addf %46, %45 : vector<8x256xf32>
      %48 = arith.divf %46, %47 : vector<8x256xf32>
      %49 = arith.mulf %36, %48 : vector<8x256xf32>
      %50 = arith.subf %49, %43 : vector<8x256xf32>
      %51 = arith.negf %37 : vector<8x256xf32>
      %52 = math.exp %51 : vector<8x256xf32>
      %cst_39 = arith.constant 1.000000e+00 : f32
      %53 = vector.broadcast %cst_39 : f32 to vector<8x256xf32>
      %54 = arith.addf %53, %52 : vector<8x256xf32>
      %55 = arith.divf %53, %54 : vector<8x256xf32>
      %56 = arith.mulf %37, %55 : vector<8x256xf32>
      %57 = arith.subf %56, %43 : vector<8x256xf32>
      %c0_40 = arith.constant 0 : index
      %c0_41 = arith.constant 0 : index
      %58 = vector.load %arg10[%c0_40, %c0_41] : memref<8x1xf32, #tpu.memory_space<vmem>>, vector<8x1xf32>
      %59 = arith.mulf %50, %50 : vector<8x256xf32>
      %cst_42 = arith.constant dense<0.000000e+00> : vector<8xf32>
      %60 = vector.multi_reduction <add>, %59, %cst_42 [1] : vector<8x256xf32> to vector<8xf32>
      %61 = vector.shape_cast %60 : vector<8xf32> to vector<8x1xf32>
      %62 = arith.addf %58, %61 : vector<8x1xf32>
      %c0_43 = arith.constant 0 : index
      %c0_44 = arith.constant 0 : index
      %63 = vector.load %arg10[%c0_43, %c0_44] : memref<8x1xf32, #tpu.memory_space<vmem>>, vector<8x1xf32>
      tpu.vector_store %arg10[%c0_43, %c0_44], %62 {strides = array<i32>} : memref<8x1xf32, #tpu.memory_space<vmem>>, vector<8x1xf32>,
      %c0_45 = arith.constant 0 : index
      %c0_46 = arith.constant 0 : index
      %64 = vector.load %arg11[%c0_45, %c0_46] : memref<8x1xf32, #tpu.memory_space<vmem>>, vector<8x1xf32>
      %65 = arith.mulf %57, %57 : vector<8x256xf32>
      %cst_47 = arith.constant dense<0.000000e+00> : vector<8xf32>
      %66 = vector.multi_reduction <add>, %65, %cst_47 [1] : vector<8x256xf32> to vector<8xf32>
      %67 = vector.shape_cast %66 : vector<8xf32> to vector<8x1xf32>
      %68 = arith.addf %64, %67 : vector<8x1xf32>
      %c0_48 = arith.constant 0 : index
      %c0_49 = arith.constant 0 : index
      %69 = vector.load %arg11[%c0_48, %c0_49] : memref<8x1xf32, #tpu.memory_space<vmem>>, vector<8x1xf32>
      tpu.vector_store %arg11[%c0_48, %c0_49], %68 {strides = array<i32>} : memref<8x1xf32, #tpu.memory_space<vmem>>, vector<8x1xf32>,
      %c0_50 = arith.constant 0 : index
      %c0_51 = arith.constant 0 : index
      %c0_52 = arith.constant 0 : index
      %70 = vector.load %arg5[%c0_50, %c0_51, %c0_52] : memref<3x8x256xf32, #tpu.memory_space<vmem>>, vector<1x8x256xf32>
      %71 = vector.shape_cast %70 : vector<1x8x256xf32> to vector<8x256xf32>
      %72 = vector.shape_cast %35 : vector<8x256xf32> to vector<1x8x256xf32>
      tpu.vector_store %arg5[%c0_50, %c0_51, %c0_52], %72 {strides = array<i32>} : memref<3x8x256xf32, #tpu.memory_space<vmem>>, vector<1x8x256xf32>,
      %c1_53 = arith.constant 1 : index
      %c0_54 = arith.constant 0 : index
      %c0_55 = arith.constant 0 : index
      %73 = vector.load %arg5[%c1_53, %c0_54, %c0_55] : memref<3x8x256xf32, #tpu.memory_space<vmem>>, vector<1x8x256xf32>
      %74 = vector.shape_cast %73 : vector<1x8x256xf32> to vector<8x256xf32>
      %75 = vector.shape_cast %36 : vector<8x256xf32> to vector<1x8x256xf32>
      tpu.vector_store %arg5[%c1_53, %c0_54, %c0_55], %75 {strides = array<i32>} : memref<3x8x256xf32, #tpu.memory_space<vmem>>, vector<1x8x256xf32>,
      %c2_56 = arith.constant 2 : index
      %c0_57 = arith.constant 0 : index
      %c0_58 = arith.constant 0 : index
      %76 = vector.load %arg5[%c2_56, %c0_57, %c0_58] : memref<3x8x256xf32, #tpu.memory_space<vmem>>, vector<1x8x256xf32>
      %77 = vector.shape_cast %76 : vector<1x8x256xf32> to vector<8x256xf32>
      %78 = vector.shape_cast %37 : vector<8x256xf32> to vector<1x8x256xf32>
      tpu.vector_store %arg5[%c2_56, %c0_57, %c0_58], %78 {strides = array<i32>} : memref<3x8x256xf32, #tpu.memory_space<vmem>>, vector<1x8x256xf32>,
    } else {
    }
    %c0_i32_28 = arith.constant 0 : i32
    %30 = arith.cmpi eq, %arg1, %c0_i32_28 : i32
    %c0_i32_29 = arith.constant 0 : i32
    %31 = arith.cmpi eq, %arg2, %c0_i32_29 : i32
    %32 = arith.andi %30, %31 : i1
    %33 = arith.extui %32 : i1 to i32
    %c0_i32_30 = arith.constant 0 : i32
    %34 = arith.cmpi ne, %33, %c0_i32_30 : i32
    scf.if %34 {
      %35 = tpu.iota {dimensions = array<i32: 1>} : vector<8x128xi32>
      %c0_31 = arith.constant 0 : index
      %c0_32 = arith.constant 0 : index
      %36 = vector.load %arg10[%c0_31, %c0_32] : memref<8x1xf32, #tpu.memory_space<vmem>>, vector<8x1xf32>
      %37 = math.sqrt %36 : vector<8x1xf32>
      %c0_33 = arith.constant 0 : index
      %c0_34 = arith.constant 0 : index
      %38 = vector.load %arg11[%c0_33, %c0_34] : memref<8x1xf32, #tpu.memory_space<vmem>>, vector<8x1xf32>
      %39 = math.sqrt %38 : vector<8x1xf32>
      %c0_i32_35 = arith.constant 0 : i32
      %40 = vector.broadcast %c0_i32_35 : i32 to vector<8x128xi32>
      %41 = arith.cmpi eq, %35, %40 : vector<8x128xi32>
      %c1_i32 = arith.constant 1 : i32
      %42 = vector.broadcast %c1_i32 : i32 to vector<8x128xi32>
      %43 = arith.cmpi eq, %35, %42 : vector<8x128xi32>
      %cst_36 = arith.constant 0.000000e+00 : f32
      %44 = vector.shape_cast %39 : vector<8x1xf32> to vector<8x1xf32>
      %45 = vector.broadcast %44 : vector<8x1xf32> to vector<8x128xf32>
      %46 = vector.broadcast %cst_36 : f32 to vector<8x128xf32>
      %47 = arith.select %43, %45, %46 : vector<8x128xi1>, vector<8x128xf32>
      %48 = vector.shape_cast %37 : vector<8x1xf32> to vector<8x1xf32>
      %49 = vector.broadcast %48 : vector<8x1xf32> to vector<8x128xf32>
      %50 = arith.select %41, %49, %47 : vector<8x128xi1>, vector<8x128xf32>
      %c0_37 = arith.constant 0 : index
      %c0_38 = arith.constant 0 : index
      %51 = vector.load %arg6[%c0_37, %c0_38] : memref<8x128xf32, #tpu.memory_space<vmem>>, vector<8x128xf32>
      tpu.vector_store %arg6[%c0_37, %c0_38], %50 {strides = array<i32>} : memref<8x128xf32, #tpu.memory_space<vmem>>, vector<8x128xf32>,
    } else {
    }
    return
  }
  func.func @transform_0(%arg0: i32, %arg1: i32, %arg2: i32) -> (i32, i32) {
    %c0_i32 = arith.constant 0 : i32
    return %arg0, %arg2 : i32, i32
  }
  func.func @transform_1(%arg0: i32, %arg1: i32, %arg2: i32) -> (i32, i32, i32) {
    %c0_i32 = arith.constant 0 : i32
    %c0_i32_0 = arith.constant 0 : i32
    return %c0_i32, %arg2, %arg1 : i32, i32, i32
  }
  func.func @transform_2(%arg0: i32, %arg1: i32, %arg2: i32) -> (i32, i32, i32) {
    %c0_i32 = arith.constant 0 : i32
    %c0_i32_0 = arith.constant 0 : i32
    return %c0_i32, %arg0, %arg1 : i32, i32, i32
  }
  func.func @transform_3(%arg0: i32, %arg1: i32, %arg2: i32) -> (i32, i32) {
    %c0_i32 = arith.constant 0 : i32
    %c0_i32_0 = arith.constant 0 : i32
    return %arg0, %c0_i32 : i32, i32
  }
}

</mosaic_0001>

<llo_original>
// kernel: tpu_custom_call.1
$region0: #{tpu_custom_call.1}
  #allocation0 [shape = 'u32[]', space=smem, size = 0x4, offset = 0x4, fixed_abs, tag = 'smem constant byte address 0x4 - core index']
  #allocation1 [shape = 'u32[72,128]{1,0:T(1,128)}', space=vmem, size = 0x9000, scoped, tag = 'internal scratch']
  #allocation2 [shape = 'f32[8,256]{1,0:T(8,128)}', space=vmem, size = 0x2000, scoped, tag = 'scratch operand']
  #allocation3 [shape = 'f32[8,256]{1,0:T(8,128)}', space=vmem, size = 0x2000, scoped, tag = 'scratch operand']
  #allocation4 [shape = 'f32[8,256]{1,0:T(8,128)}', space=vmem, size = 0x2000, scoped, tag = 'scratch operand']
  #allocation5 [shape = 'f32[8,1]{1,0:T(8,128)}', space=vmem, size = 0x1000, scoped, tag = 'scratch operand']
  #allocation6 [shape = 'f32[8,1]{1,0:T(8,128)}', space=vmem, size = 0x1000, scoped, tag = 'scratch operand']
  %s0 = inlined_call_operand.hbm [shape: f32[8,256], index: 0, kind: input, shape index: {}]
  %s1 = inlined_call_operand.hbm [shape: f32[3,256,256], index: 1, kind: input, shape index: {}]
  %s2 = inlined_call_operand.hbm [shape: f32[3,8,256], index: 2, kind: output, shape index: {0}]
  %s3 = inlined_call_operand.hbm [shape: f32[8,128], index: 3, kind: output, shape index: {1}]
  %4 = xla_tuple %s2, %s3
  %s5 = sld [smem:[#allocation0]]
  $region50: #{tpu_custom_call.1} parent=0
    _
  %s7 = ssub.s32 1, %s5
  %s8 = scalar_select 0, %s7, %s5
  $region1: #{tpu_custom_call.1} parent=0
    #allocation7 [shape = 'u8[8192]{0}', space=vmem, size = 0x2000, scoped, tag = 'input window, operand 0, single buffered']
    #allocation8 [shape = 's32[1]{0}', space=sflag, size = 0x4, scoped, tag = 'scoped memory for tpu_custom_call.1']
    #allocation9 [shape = 's32[1]{0}', space=sflag, size = 0x4, scoped, tag = 'scoped memory for tpu_custom_call.1']
    #allocation10 [shape = 'u8[786432]{0}', space=vmem, size = 0xc0000, scoped, tag = 'input window, operand 1, single buffered']
    #allocation11 [shape = 's32[1]{0}', space=sflag, size = 0x4, scoped, tag = 'scoped memory for tpu_custom_call.1']
    #allocation12 [shape = 'u8[24576]{0}', space=vmem, size = 0x6000, scoped, tag = 'output window, operand 0, single buffered']
    #allocation13 [shape = 'u8[4096]{0}', space=vmem, size = 0x1000, scoped, tag = 'output window, operand 1, single buffered']
    #allocation14 [shape = 's32[1]{0}', space=sflag, size = 0x4, scoped, tag = 'scoped memory for tpu_custom_call.1']
    %9 = vsyncpa [#allocation8], 0
    %10 = vsyncpa [#allocation11], 0
    %11 = vsyncpa [#allocation9], 0
    %12 = vsyncpa [#allocation14], 0
    // Predicated region
    $region2: #{tpu_custom_call.1} parent=1 // pred_check
      _
    $region3: #{tpu_custom_call.1} parent=1 // pred_check_branch
      %14 = sbr.rel (0) target = $region5
    $region4: #{tpu_custom_call.1} parent=1 // pred_region
      %16 = vsyncadd [#allocation8], 0
      %s18 = sshll.u32 %s0, 4
      %s19 = int_to_ptr.hbm [resolvable:$true] %s18
      %s20 = sshll.u32 [#allocation7], 4
      %s21 = int_to_ptr.vmem [resolvable:$true] %s20
      %23 = dma.hbm_to_vmem [thread:$0]  %s19, 256, %s21, [#allocation8]
    $region5: #{tpu_custom_call.1} parent=1 // pred_fallthru
      _
    // Predicated region
    $region6: #{tpu_custom_call.1} parent=1 // pred_check
      _
    $region7: #{tpu_custom_call.1} parent=1 // pred_check_branch
      %25 = sbr.rel (0) target = $region9
    $region8: #{tpu_custom_call.1} parent=1 // pred_region
      %27 = vsyncadd [#allocation11], 0
      %s28 = sshll.u32 %s1, 4
      %s29 = int_to_ptr.hbm [resolvable:$true] %s28
      %s30 = sshll.u32 [#allocation10], 4
      %s31 = int_to_ptr.vmem [resolvable:$true] %s30
      %36 = dma.hbm_to_vmem [thread:$0]  %s29, 24576, %s31, [#allocation11], 256, 256, 16
    $region9: #{tpu_custom_call.1} parent=1 // pred_fallthru
      _
    // Predicated region
    $region10: #{tpu_custom_call.1} parent=1 // pred_check
      _
    $region11: #{tpu_custom_call.1} parent=1 // pred_check_branch
      %38 = sbr.rel (0) target = $region13
    $region12: #{tpu_custom_call.1} parent=1 // pred_region
      %40 = dma.done [#allocation8], 256
    $region13: #{tpu_custom_call.1} parent=1 // pred_fallthru
      _
    // Predicated region
    $region14: #{tpu_custom_call.1} parent=1 // pred_check
      _
    $region15: #{tpu_custom_call.1} parent=1 // pred_check_branch
      %42 = sbr.rel (0) target = $region17
    $region16: #{tpu_custom_call.1} parent=1 // pred_region
      %44 = dma.done [#allocation11], 24576
    $region17: #{tpu_custom_call.1} parent=1 // pred_fallthru
      _
    %p45 = scmp.eq.s32.totalorder 0, 0
    // Predicated region
    $region18: #{tpu_custom_call.1} parent=1 // pred_check
      %p46 = pneg %p45
    $region19: #{tpu_custom_call.1} parent=1 // pred_check_branch
      %48 = sbr.rel (%p46) target = $region21
    $region20: #{tpu_custom_call.1} parent=1 // pred_region
      %49 = vst [vmem:[#allocation2] sm:$0xff] 0.0
      %50 = vst [vmem:[#allocation2 + $0x8] sm:$0xff] 0.0
      %51 = vst [vmem:[#allocation3] sm:$0xff] 0.0
      %52 = vst [vmem:[#allocation3 + $0x8] sm:$0xff] 0.0
      %53 = vst [vmem:[#allocation4] sm:$0xff] 0.0
      %54 = vst [vmem:[#allocation4 + $0x8] sm:$0xff] 0.0
    $region21: #{tpu_custom_call.1} parent=1 // pred_fallthru
      _
    %p55 = scmp.eq.s32.totalorder 0, 0
    %p56 = pnand %p55, %p45
    %p57 = pneg %p56
    // Predicated region
    $region22: #{tpu_custom_call.1} parent=1 // pred_check
      _
    $region23: #{tpu_custom_call.1} parent=1 // pred_check_branch
      %59 = sbr.rel (%p56) target = $region25
    $region24: #{tpu_custom_call.1} parent=1 // pred_region
      %vm60 = vcmask 7168
      %61 = vst.msk [vmem:[#allocation5] sm:$0xff] %vm60, 0.0
      %62 = vst.msk [vmem:[#allocation6] sm:$0xff] %vm60, 0.0
    $region25: #{tpu_custom_call.1} parent=1 // pred_fallthru
      _
    %v63 = vld [vmem:[#allocation7] sm:$0xff]
    %v64 = vld [vmem:[#allocation7 + $0x8] sm:$0xff]
    %v65 = vld [vmem:[#allocation2] sm:$0xff]
    %v66 = vld [vmem:[#allocation2 + $0x8] sm:$0xff]
    %v67 = vld [vmem:[#allocation10] sm:$0xff]
    %v68 = vld [vmem:[#allocation10 + $0x8] sm:$0xff]
    %v69 = vld [vmem:[#allocation10 + $0x10] sm:$0xff]
    %v70 = vld [vmem:[#allocation10 + $0x18] sm:$0xff]
    %v71 = vld [vmem:[#allocation10 + $0x20] sm:$0xff]
    %v72 = vld [vmem:[#allocation10 + $0x28] sm:$0xff]
    %v73 = vld [vmem:[#allocation10 + $0x30] sm:$0xff]
    %v74 = vld [vmem:[#allocation10 + $0x38] sm:$0xff]
    %v75 = vld [vmem:[#allocation10 + $0x40] sm:$0xff]
    %v76 = vld [vmem:[#allocation10 + $0x48] sm:$0xff]
    %v77 = vld [vmem:[#allocation10 + $0x50] sm:$0xff]
    %v78 = vld [vmem:[#allocation10 + $0x58] sm:$0xff]
    %v79 = vld [vmem:[#allocation10 + $0x60] sm:$0xff]
    %v80 = vld [vmem:[#allocation10 + $0x68] sm:$0xff]
    %v81 = vld [vmem:[#allocation10 + $0x70] sm:$0xff]
    %v82 = vld [vmem:[#allocation10 + $0x78] sm:$0xff]
    %v83 = vld [vmem:[#allocation10 + $0x80] sm:$0xff]
    %v84 = vld [vmem:[#allocation10 + $0x88] sm:$0xff]
    %v85 = vld [vmem:[#allocation10 + $0x90] sm:$0xff]
    %v86 = vld [vmem:[#allocation10 + $0x98] sm:$0xff]
    %v87 = vld [vmem:[#allocation10 + $0xa0] sm:$0xff]
    %v88 = vld [vmem:[#allocation10 + $0xa8] sm:$0xff]
    %v89 = vld [vmem:[#allocation10 + $0xb0] sm:$0xff]
    %v90 = vld [vmem:[#allocation10 + $0xb8] sm:$0xff]
    %v91 = vld [vmem:[#allocation10 + $0xc0] sm:$0xff]
    %v92 = vld [vmem:[#allocation10 + $0xc8] sm:$0xff]
    %v93 = vld [vmem:[#allocation10 + $0xd0] sm:$0xff]
    %v94 = vld [vmem:[#allocation10 + $0xd8] sm:$0xff]
    %v95 = vld [vmem:[#allocation10 + $0xe0] sm:$0xff]
    %v96 = vld [vmem:[#allocation10 + $0xe8] sm:$0xff]
    %v97 = vld [vmem:[#allocation10 + $0xf0] sm:$0xff]
    %v98 = vld [vmem:[#allocation10 + $0xf8] sm:$0xff]
    %v99 = vld [vmem:[#allocation10 + $0x100] sm:$0xff]
    %v100 = vld [vmem:[#allocation10 + $0x108] sm:$0xff]
    %v101 = vld [vmem:[#allocation10 + $0x110] sm:$0xff]
    %v102 = vld [vmem:[#allocation10 + $0x118] sm:$0xff]
    %v103 = vld [vmem:[#allocation10 + $0x120] sm:$0xff]
    %v104 = vld [vmem:[#allocation10 + $0x128] sm:$0xff]
    %v105 = vld [vmem:[#allocation10 + $0x130] sm:$0xff]
    %v106 = vld [vmem:[#allocation10 + $0x138] sm:$0xff]
    %v107 = vld [vmem:[#allocation10 + $0x140] sm:$0xff]
    %v108 = vld [vmem:[#allocation10 + $0x148] sm:$0xff]
    %v109 = vld [vmem:[#allocation10 + $0x150] sm:$0xff]
    %v110 = vld [vmem:[#allocation10 + $0x158] sm:$0xff]
    %v111 = vld [vmem:[#allocation10 + $0x160] sm:$0xff]
    %v112 = vld [vmem:[#allocation10 + $0x168] sm:$0xff]
    %v113 = vld [vmem:[#allocation10 + $0x170] sm:$0xff]
    %v114 = vld [vmem:[#allocation10 + $0x178] sm:$0xff]
    %v115 = vld [vmem:[#allocation10 + $0x180] sm:$0xff]
    %v116 = vld [vmem:[#allocation10 + $0x188] sm:$0xff]
    %v117 = vld [vmem:[#allocation10 + $0x190] sm:$0xff]
    %v118 = vld [vmem:[#allocation10 + $0x198] sm:$0xff]
    %v119 = vld [vmem:[#allocation10 + $0x1a0] sm:$0xff]
    %v120 = vld [vmem:[#allocation10 + $0x1a8] sm:$0xff]
    %v121 = vld [vmem:[#allocation10 + $0x1b0] sm:$0xff]
    %v122 = vld [vmem:[#allocation10 + $0x1b8] sm:$0xff]
    %v123 = vld [vmem:[#allocation10 + $0x1c0] sm:$0xff]
    %v124 = vld [vmem:[#allocation10 + $0x1c8] sm:$0xff]
    %v125 = vld [vmem:[#allocation10 + $0x1d0] sm:$0xff]
    %v126 = vld [vmem:[#allocation10 + $0x1d8] sm:$0xff]
    %v127 = vld [vmem:[#allocation10 + $0x1e0] sm:$0xff]
    %v128 = vld [vmem:[#allocation10 + $0x1e8] sm:$0xff]
    %v129 = vld [vmem:[#allocation10 + $0x1f0] sm:$0xff]
    %v130 = vld [vmem:[#allocation10 + $0x1f8] sm:$0xff]
    %131 = vmatpush.msra.mxu0 %v97
    %132 = vmatpush.msra.mxu0 %v95
    %133 = vmatpush.msra.mxu0 %v93
    %134 = vmatpush.msra.mxu0 %v91
    %135 = vmatpush.msra.mxu0 %v89
    %136 = vmatpush.msra.mxu0 %v87
    %137 = vmatpush.msra.mxu0 %v85
    %138 = vmatpush.msra.mxu0 %v83
    %139 = vmatpush.msra.mxu0 %v81
    %140 = vmatpush.msra.mxu0 %v79
    %141 = vmatpush.msra.mxu0 %v77
    %142 = vmatpush.msra.mxu0 %v75
    %143 = vmatpush.msra.mxu0 %v73
    %144 = vmatpush.msra.mxu0 %v71
    %145 = vmatpush.msra.mxu0 %v69
    %146 = vmatpush.msra.mxu0 %v67
    %147 = vmatmul.f32.gmra.mxu0 %v63
    %v148 = vpop.f32.mrf.mxu0
    %v149 = vadd.f32 0.0, %v148
    %150 = vdwg.mxu0
    %151 = vmatpush.msra.mxu0 %v129
    %152 = vmatpush.msra.mxu0 %v127
    %153 = vmatpush.msra.mxu0 %v125
    %154 = vmatpush.msra.mxu0 %v123
    %155 = vmatpush.msra.mxu0 %v121
    %156 = vmatpush.msra.mxu0 %v119
    %157 = vmatpush.msra.mxu0 %v117
    %158 = vmatpush.msra.mxu0 %v115
    %159 = vmatpush.msra.mxu0 %v113
    %160 = vmatpush.msra.mxu0 %v111
    %161 = vmatpush.msra.mxu0 %v109
    %162 = vmatpush.msra.mxu0 %v107
    %163 = vmatpush.msra.mxu0 %v105
    %164 = vmatpush.msra.mxu0 %v103
    %165 = vmatpush.msra.mxu0 %v101
    %166 = vmatpush.msra.mxu0 %v99
    %167 = vmatmul.f32.gmra.mxu0 %v64
    %v168 = vpop.f32.mrf.mxu0
    %v169 = vadd.f32 %v149, %v168
    %170 = vdwg.mxu0
    %171 = vmatpush.msra.mxu0 %v98
    %172 = vmatpush.msra.mxu0 %v96
    %173 = vmatpush.msra.mxu0 %v94
    %174 = vmatpush.msra.mxu0 %v92
    %175 = vmatpush.msra.mxu0 %v90
    %176 = vmatpush.msra.mxu0 %v88
    %177 = vmatpush.msra.mxu0 %v86
    %178 = vmatpush.msra.mxu0 %v84
    %179 = vmatpush.msra.mxu0 %v82
    %180 = vmatpush.msra.mxu0 %v80
    %181 = vmatpush.msra.mxu0 %v78
    %182 = vmatpush.msra.mxu0 %v76
    %183 = vmatpush.msra.mxu0 %v74
    %184 = vmatpush.msra.mxu0 %v72
    %185 = vmatpush.msra.mxu0 %v70
    %186 = vmatpush.msra.mxu0 %v68
    %187 = vmatmul.f32.gmra.mxu0 %v63
    %v188 = vpop.f32.mrf.mxu0
    %v189 = vadd.f32 0.0, %v188
    %190 = vdwg.mxu0
    %191 = vmatpush.msra.mxu0 %v130
    %192 = vmatpush.msra.mxu0 %v128
    %193 = vmatpush.msra.mxu0 %v126
    %194 = vmatpush.msra.mxu0 %v124
    %195 = vmatpush.msra.mxu0 %v122
    %196 = vmatpush.msra.mxu0 %v120
    %197 = vmatpush.msra.mxu0 %v118
    %198 = vmatpush.msra.mxu0 %v116
    %199 = vmatpush.msra.mxu0 %v114
    %200 = vmatpush.msra.mxu0 %v112
    %201 = vmatpush.msra.mxu0 %v110
    %202 = vmatpush.msra.mxu0 %v108
    %203 = vmatpush.msra.mxu0 %v106
    %204 = vmatpush.msra.mxu0 %v104
    %205 = vmatpush.msra.mxu0 %v102
    %206 = vmatpush.msra.mxu0 %v100
    %207 = vmatmul.f32.gmra.mxu0 %v64
    %v208 = vpop.f32.mrf.mxu0
    %v209 = vadd.f32 %v189, %v208
    %210 = vdwg.mxu0
    %v211 = vadd.f32 %v65, %v169
    %v212 = vadd.f32 %v66, %v209
    %213 = vst [vmem:[#allocation2] sm:$0xff] %v211
    %214 = vst [vmem:[#allocation2 + $0x8] sm:$0xff] %v212
    %v215 = vld [vmem:[#allocation3] sm:$0xff]
    %v216 = vld [vmem:[#allocation3 + $0x8] sm:$0xff]
    %s217 = scalar_lea.vmem [#allocation10], 512
    %v218 = vld [vmem:[%s217] sm:$0xff]
    %v219 = vld [vmem:[%s217 + $0x8] sm:$0xff]
    %v220 = vld [vmem:[%s217 + $0x10] sm:$0xff]
    %v221 = vld [vmem:[%s217 + $0x18] sm:$0xff]
    %v222 = vld [vmem:[%s217 + $0x20] sm:$0xff]
    %v223 = vld [vmem:[%s217 + $0x28] sm:$0xff]
    %v224 = vld [vmem:[%s217 + $0x30] sm:$0xff]
    %v225 = vld [vmem:[%s217 + $0x38] sm:$0xff]
    %v226 = vld [vmem:[%s217 + $0x40] sm:$0xff]
    %v227 = vld [vmem:[%s217 + $0x48] sm:$0xff]
    %v228 = vld [vmem:[%s217 + $0x50] sm:$0xff]
    %v229 = vld [vmem:[%s217 + $0x58] sm:$0xff]
    %v230 = vld [vmem:[%s217 + $0x60] sm:$0xff]
    %v231 = vld [vmem:[%s217 + $0x68] sm:$0xff]
    %v232 = vld [vmem:[%s217 + $0x70] sm:$0xff]
    %v233 = vld [vmem:[%s217 + $0x78] sm:$0xff]
    %v234 = vld [vmem:[%s217 + $0x80] sm:$0xff]
    %v235 = vld [vmem:[%s217 + $0x88] sm:$0xff]
    %v236 = vld [vmem:[%s217 + $0x90] sm:$0xff]
    %v237 = vld [vmem:[%s217 + $0x98] sm:$0xff]
    %v238 = vld [vmem:[%s217 + $0xa0] sm:$0xff]
    %v239 = vld [vmem:[%s217 + $0xa8] sm:$0xff]
    %v240 = vld [vmem:[%s217 + $0xb0] sm:$0xff]
    %v241 = vld [vmem:[%s217 + $0xb8] sm:$0xff]
    %v242 = vld [vmem:[%s217 + $0xc0] sm:$0xff]
    %v243 = vld [vmem:[%s217 + $0xc8] sm:$0xff]
    %v244 = vld [vmem:[%s217 + $0xd0] sm:$0xff]
    %v245 = vld [vmem:[%s217 + $0xd8] sm:$0xff]
    %v246 = vld [vmem:[%s217 + $0xe0] sm:$0xff]
    %v247 = vld [vmem:[%s217 + $0xe8] sm:$0xff]
    %v248 = vld [vmem:[%s217 + $0xf0] sm:$0xff]
    %v249 = vld [vmem:[%s217 + $0xf8] sm:$0xff]
    %v250 = vld [vmem:[%s217 + $0x100] sm:$0xff]
    %v251 = vld [vmem:[%s217 + $0x108] sm:$0xff]
    %v252 = vld [vmem:[%s217 + $0x110] sm:$0xff]
    %v253 = vld [vmem:[%s217 + $0x118] sm:$0xff]
    %v254 = vld [vmem:[%s217 + $0x120] sm:$0xff]
    %v255 = vld [vmem:[%s217 + $0x128] sm:$0xff]
    %v256 = vld [vmem:[%s217 + $0x130] sm:$0xff]
    %v257 = vld [vmem:[%s217 + $0x138] sm:$0xff]
    %v258 = vld [vmem:[%s217 + $0x140] sm:$0xff]
    %v259 = vld [vmem:[%s217 + $0x148] sm:$0xff]
    %v260 = vld [vmem:[%s217 + $0x150] sm:$0xff]
    %v261 = vld [vmem:[%s217 + $0x158] sm:$0xff]
    %v262 = vld [vmem:[%s217 + $0x160] sm:$0xff]
    %v263 = vld [vmem:[%s217 + $0x168] sm:$0xff]
    %v264 = vld [vmem:[%s217 + $0x170] sm:$0xff]
    %v265 = vld [vmem:[%s217 + $0x178] sm:$0xff]
    %v266 = vld [vmem:[%s217 + $0x180] sm:$0xff]
    %v267 = vld [vmem:[%s217 + $0x188] sm:$0xff]
    %v268 = vld [vmem:[%s217 + $0x190] sm:$0xff]
    %v269 = vld [vmem:[%s217 + $0x198] sm:$0xff]
    %v270 = vld [vmem:[%s217 + $0x1a0] sm:$0xff]
    %v271 = vld [vmem:[%s217 + $0x1a8] sm:$0xff]
    %v272 = vld [vmem:[%s217 + $0x1b0] sm:$0xff]
    %v273 = vld [vmem:[%s217 + $0x1b8] sm:$0xff]
    %v274 = vld [vmem:[%s217 + $0x1c0] sm:$0xff]
    %v275 = vld [vmem:[%s217 + $0x1c8] sm:$0xff]
    %v276 = vld [vmem:[%s217 + $0x1d0] sm:$0xff]
    %v277 = vld [vmem:[%s217 + $0x1d8] sm:$0xff]
    %v278 = vld [vmem:[%s217 + $0x1e0] sm:$0xff]
    %v279 = vld [vmem:[%s217 + $0x1e8] sm:$0xff]
    %v280 = vld [vmem:[%s217 + $0x1f0] sm:$0xff]
    %v281 = vld [vmem:[%s217 + $0x1f8] sm:$0xff]
    %282 = vmatpush.msra.mxu0 %v248
    %283 = vmatpush.msra.mxu0 %v246
    %284 = vmatpush.msra.mxu0 %v244
    %285 = vmatpush.msra.mxu0 %v242
    %286 = vmatpush.msra.mxu0 %v240
    %287 = vmatpush.msra.mxu0 %v238
    %288 = vmatpush.msra.mxu0 %v236
    %289 = vmatpush.msra.mxu0 %v234
    %290 = vmatpush.msra.mxu0 %v232
    %291 = vmatpush.msra.mxu0 %v230
    %292 = vmatpush.msra.mxu0 %v228
    %293 = vmatpush.msra.mxu0 %v226
    %294 = vmatpush.msra.mxu0 %v224
    %295 = vmatpush.msra.mxu0 %v222
    %296 = vmatpush.msra.mxu0 %v220
    %297 = vmatpush.msra.mxu0 %v218
    %298 = vmatmul.f32.gmra.mxu0 %v63
    %v299 = vpop.f32.mrf.mxu0
    %v300 = vadd.f32 0.0, %v299
    %301 = vdwg.mxu0
    %302 = vmatpush.msra.mxu0 %v280
    %303 = vmatpush.msra.mxu0 %v278
    %304 = vmatpush.msra.mxu0 %v276
    %305 = vmatpush.msra.mxu0 %v274
    %306 = vmatpush.msra.mxu0 %v272
    %307 = vmatpush.msra.mxu0 %v270
    %308 = vmatpush.msra.mxu0 %v268
    %309 = vmatpush.msra.mxu0 %v266
    %310 = vmatpush.msra.mxu0 %v264
    %311 = vmatpush.msra.mxu0 %v262
    %312 = vmatpush.msra.mxu0 %v260
    %313 = vmatpush.msra.mxu0 %v258
    %314 = vmatpush.msra.mxu0 %v256
    %315 = vmatpush.msra.mxu0 %v254
    %316 = vmatpush.msra.mxu0 %v252
    %317 = vmatpush.msra.mxu0 %v250
    %318 = vmatmul.f32.gmra.mxu0 %v64
    %v319 = vpop.f32.mrf.mxu0
    %v320 = vadd.f32 %v300, %v319
    %321 = vdwg.mxu0
    %322 = vmatpush.msra.mxu0 %v249
    %323 = vmatpush.msra.mxu0 %v247
    %324 = vmatpush.msra.mxu0 %v245
    %325 = vmatpush.msra.mxu0 %v243
    %326 = vmatpush.msra.mxu0 %v241
    %327 = vmatpush.msra.mxu0 %v239
    %328 = vmatpush.msra.mxu0 %v237
    %329 = vmatpush.msra.mxu0 %v235
    %330 = vmatpush.msra.mxu0 %v233
    %331 = vmatpush.msra.mxu0 %v231
    %332 = vmatpush.msra.mxu0 %v229
    %333 = vmatpush.msra.mxu0 %v227
    %334 = vmatpush.msra.mxu0 %v225
    %335 = vmatpush.msra.mxu0 %v223
    %336 = vmatpush.msra.mxu0 %v221
    %337 = vmatpush.msra.mxu0 %v219
    %338 = vmatmul.f32.gmra.mxu0 %v63
    %v339 = vpop.f32.mrf.mxu0
    %v340 = vadd.f32 0.0, %v339
    %341 = vdwg.mxu0
    %342 = vmatpush.msra.mxu0 %v281
    %343 = vmatpush.msra.mxu0 %v279
    %344 = vmatpush.msra.mxu0 %v277
    %345 = vmatpush.msra.mxu0 %v275
    %346 = vmatpush.msra.mxu0 %v273
    %347 = vmatpush.msra.mxu0 %v271
    %348 = vmatpush.msra.mxu0 %v269
    %349 = vmatpush.msra.mxu0 %v267
    %350 = vmatpush.msra.mxu0 %v265
    %351 = vmatpush.msra.mxu0 %v263
    %352 = vmatpush.msra.mxu0 %v261
    %353 = vmatpush.msra.mxu0 %v259
    %354 = vmatpush.msra.mxu0 %v257
    %355 = vmatpush.msra.mxu0 %v255
    %356 = vmatpush.msra.mxu0 %v253
    %357 = vmatpush.msra.mxu0 %v251
    %358 = vmatmul.f32.gmra.mxu0 %v64
    %v359 = vpop.f32.mrf.mxu0
    %v360 = vadd.f32 %v340, %v359
    %361 = vdwg.mxu0
    %v362 = vadd.f32 %v215, %v320
    %v363 = vadd.f32 %v216, %v360
    %364 = vst [vmem:[#allocation3] sm:$0xff] %v362
    %365 = vst [vmem:[#allocation3 + $0x8] sm:$0xff] %v363
    %v366 = vld [vmem:[#allocation4] sm:$0xff]
    %v367 = vld [vmem:[#allocation4 + $0x8] sm:$0xff]
    %s368 = scalar_lea.vmem [#allocation10], 1024
    %v369 = vld [vmem:[%s368] sm:$0xff]
    %v370 = vld [vmem:[%s368 + $0x8] sm:$0xff]
    %v371 = vld [vmem:[%s368 + $0x10] sm:$0xff]
    %v372 = vld [vmem:[%s368 + $0x18] sm:$0xff]
    %v373 = vld [vmem:[%s368 + $0x20] sm:$0xff]
    %v374 = vld [vmem:[%s368 + $0x28] sm:$0xff]
    %v375 = vld [vmem:[%s368 + $0x30] sm:$0xff]
    %v376 = vld [vmem:[%s368 + $0x38] sm:$0xff]
    %v377 = vld [vmem:[%s368 + $0x40] sm:$0xff]
    %v378 = vld [vmem:[%s368 + $0x48] sm:$0xff]
    %v379 = vld [vmem:[%s368 + $0x50] sm:$0xff]
    %v380 = vld [vmem:[%s368 + $0x58] sm:$0xff]
    %v381 = vld [vmem:[%s368 + $0x60] sm:$0xff]
    %v382 = vld [vmem:[%s368 + $0x68] sm:$0xff]
    %v383 = vld [vmem:[%s368 + $0x70] sm:$0xff]
    %v384 = vld [vmem:[%s368 + $0x78] sm:$0xff]
    %v385 = vld [vmem:[%s368 + $0x80] sm:$0xff]
    %v386 = vld [vmem:[%s368 + $0x88] sm:$0xff]
    %v387 = vld [vmem:[%s368 + $0x90] sm:$0xff]
    %v388 = vld [vmem:[%s368 + $0x98] sm:$0xff]
    %v389 = vld [vmem:[%s368 + $0xa0] sm:$0xff]
    %v390 = vld [vmem:[%s368 + $0xa8] sm:$0xff]
    %v391 = vld [vmem:[%s368 + $0xb0] sm:$0xff]
    %v392 = vld [vmem:[%s368 + $0xb8] sm:$0xff]
    %v393 = vld [vmem:[%s368 + $0xc0] sm:$0xff]
    %v394 = vld [vmem:[%s368 + $0xc8] sm:$0xff]
    %v395 = vld [vmem:[%s368 + $0xd0] sm:$0xff]
    %v396 = vld [vmem:[%s368 + $0xd8] sm:$0xff]
    %v397 = vld [vmem:[%s368 + $0xe0] sm:$0xff]
    %v398 = vld [vmem:[%s368 + $0xe8] sm:$0xff]
    %v399 = vld [vmem:[%s368 + $0xf0] sm:$0xff]
    %v400 = vld [vmem:[%s368 + $0xf8] sm:$0xff]
    %v401 = vld [vmem:[%s368 + $0x100] sm:$0xff]
    %v402 = vld [vmem:[%s368 + $0x108] sm:$0xff]
    %v403 = vld [vmem:[%s368 + $0x110] sm:$0xff]
    %v404 = vld [vmem:[%s368 + $0x118] sm:$0xff]
    %v405 = vld [vmem:[%s368 + $0x120] sm:$0xff]
    %v406 = vld [vmem:[%s368 + $0x128] sm:$0xff]
    %v407 = vld [vmem:[%s368 + $0x130] sm:$0xff]
    %v408 = vld [vmem:[%s368 + $0x138] sm:$0xff]
    %v409 = vld [vmem:[%s368 + $0x140] sm:$0xff]
    %v410 = vld [vmem:[%s368 + $0x148] sm:$0xff]
    %v411 = vld [vmem:[%s368 + $0x150] sm:$0xff]
    %v412 = vld [vmem:[%s368 + $0x158] sm:$0xff]
    %v413 = vld [vmem:[%s368 + $0x160] sm:$0xff]
    %v414 = vld [vmem:[%s368 + $0x168] sm:$0xff]
    %v415 = vld [vmem:[%s368 + $0x170] sm:$0xff]
    %v416 = vld [vmem:[%s368 + $0x178] sm:$0xff]
    %v417 = vld [vmem:[%s368 + $0x180] sm:$0xff]
    %v418 = vld [vmem:[%s368 + $0x188] sm:$0xff]
    %v419 = vld [vmem:[%s368 + $0x190] sm:$0xff]
    %v420 = vld [vmem:[%s368 + $0x198] sm:$0xff]
    %v421 = vld [vmem:[%s368 + $0x1a0] sm:$0xff]
    %v422 = vld [vmem:[%s368 + $0x1a8] sm:$0xff]
    %v423 = vld [vmem:[%s368 + $0x1b0] sm:$0xff]
    %v424 = vld [vmem:[%s368 + $0x1b8] sm:$0xff]
    %v425 = vld [vmem:[%s368 + $0x1c0] sm:$0xff]
    %v426 = vld [vmem:[%s368 + $0x1c8] sm:$0xff]
    %v427 = vld [vmem:[%s368 + $0x1d0] sm:$0xff]
    %v428 = vld [vmem:[%s368 + $0x1d8] sm:$0xff]
    %v429 = vld [vmem:[%s368 + $0x1e0] sm:$0xff]
    %v430 = vld [vmem:[%s368 + $0x1e8] sm:$0xff]
    %v431 = vld [vmem:[%s368 + $0x1f0] sm:$0xff]
    %v432 = vld [vmem:[%s368 + $0x1f8] sm:$0xff]
    %433 = vmatpush.msra.mxu0 %v399
    %434 = vmatpush.msra.mxu0 %v397
    %435 = vmatpush.msra.mxu0 %v395
    %436 = vmatpush.msra.mxu0 %v393
    %437 = vmatpush.msra.mxu0 %v391
    %438 = vmatpush.msra.mxu0 %v389
    %439 = vmatpush.msra.mxu0 %v387
    %440 = vmatpush.msra.mxu0 %v385
    %441 = vmatpush.msra.mxu0 %v383
    %442 = vmatpush.msra.mxu0 %v381
    %443 = vmatpush.msra.mxu0 %v379
    %444 = vmatpush.msra.mxu0 %v377
    %445 = vmatpush.msra.mxu0 %v375
    %446 = vmatpush.msra.mxu0 %v373
    %447 = vmatpush.msra.mxu0 %v371
    %448 = vmatpush.msra.mxu0 %v369
    %449 = vmatmul.f32.gmra.mxu0 %v63
    %v450 = vpop.f32.mrf.mxu0
    %v451 = vadd.f32 0.0, %v450
    %452 = vdwg.mxu0
    %453 = vmatpush.msra.mxu0 %v431
    %454 = vmatpush.msra.mxu0 %v429
    %455 = vmatpush.msra.mxu0 %v427
    %456 = vmatpush.msra.mxu0 %v425
    %457 = vmatpush.msra.mxu0 %v423
    %458 = vmatpush.msra.mxu0 %v421
    %459 = vmatpush.msra.mxu0 %v419
    %460 = vmatpush.msra.mxu0 %v417
    %461 = vmatpush.msra.mxu0 %v415
    %462 = vmatpush.msra.mxu0 %v413
    %463 = vmatpush.msra.mxu0 %v411
    %464 = vmatpush.msra.mxu0 %v409
    %465 = vmatpush.msra.mxu0 %v407
    %466 = vmatpush.msra.mxu0 %v405
    %467 = vmatpush.msra.mxu0 %v403
    %468 = vmatpush.msra.mxu0 %v401
    %469 = vmatmul.f32.gmra.mxu0 %v64
    %v470 = vpop.f32.mrf.mxu0
    %v471 = vadd.f32 %v451, %v470
    %472 = vdwg.mxu0
    %473 = vmatpush.msra.mxu0 %v400
    %474 = vmatpush.msra.mxu0 %v398
    %475 = vmatpush.msra.mxu0 %v396
    %476 = vmatpush.msra.mxu0 %v394
    %477 = vmatpush.msra.mxu0 %v392
    %478 = vmatpush.msra.mxu0 %v390
    %479 = vmatpush.msra.mxu0 %v388
    %480 = vmatpush.msra.mxu0 %v386
    %481 = vmatpush.msra.mxu0 %v384
    %482 = vmatpush.msra.mxu0 %v382
    %483 = vmatpush.msra.mxu0 %v380
    %484 = vmatpush.msra.mxu0 %v378
    %485 = vmatpush.msra.mxu0 %v376
    %486 = vmatpush.msra.mxu0 %v374
    %487 = vmatpush.msra.mxu0 %v372
    %488 = vmatpush.msra.mxu0 %v370
    %489 = vmatmul.f32.gmra.mxu0 %v63
    %v490 = vpop.f32.mrf.mxu0
    %v491 = vadd.f32 0.0, %v490
    %492 = vdwg.mxu0
    %493 = vmatpush.msra.mxu0 %v432
    %494 = vmatpush.msra.mxu0 %v430
    %495 = vmatpush.msra.mxu0 %v428
    %496 = vmatpush.msra.mxu0 %v426
    %497 = vmatpush.msra.mxu0 %v424
    %498 = vmatpush.msra.mxu0 %v422
    %499 = vmatpush.msra.mxu0 %v420
    %500 = vmatpush.msra.mxu0 %v418
    %501 = vmatpush.msra.mxu0 %v416
    %502 = vmatpush.msra.mxu0 %v414
    %503 = vmatpush.msra.mxu0 %v412
    %504 = vmatpush.msra.mxu0 %v410
    %505 = vmatpush.msra.mxu0 %v408
    %506 = vmatpush.msra.mxu0 %v406
    %507 = vmatpush.msra.mxu0 %v404
    %508 = vmatpush.msra.mxu0 %v402
    %509 = vmatmul.f32.gmra.mxu0 %v64
    %v510 = vpop.f32.mrf.mxu0
    %v511 = vadd.f32 %v491, %v510
    %512 = vdwg.mxu0
    %v513 = vadd.f32 %v366, %v471
    %v514 = vadd.f32 %v367, %v511
    %515 = vst [vmem:[#allocation4] sm:$0xff] %v513
    %516 = vst [vmem:[#allocation4 + $0x8] sm:$0xff] %v514
    // Predicated region
    $region26: #{tpu_custom_call.1} parent=1 // pred_check
      %p517 = pneg %p45
    $region27: #{tpu_custom_call.1} parent=1 // pred_check_branch
      %519 = sbr.rel (%p517) target = $region29
    $region28: #{tpu_custom_call.1} parent=1 // pred_region
      %v520 = vld [vmem:[#allocation2] sm:$0xff]
      %v521 = vld [vmem:[#allocation2 + $0x8] sm:$0xff]
      %v522 = vld [vmem:[#allocation3] sm:$0xff]
      %v523 = vld [vmem:[#allocation3 + $0x8] sm:$0xff]
      %v524 = vld [vmem:[#allocation4] sm:$0xff]
      %v525 = vld [vmem:[#allocation4 + $0x8] sm:$0xff]
      %v526 = vxor.u32 %v520, 2147483648
      %v527 = vxor.u32 %v521, 2147483648
      %v528 = vmul.f32 %v526, 1.442695
      %v529 = vpow.pop %v528
      %v530 = vmul.f32 %v527, 1.442695
      %v531 = vpow.pop %v530
      %v532 = vadd.f32 %v529, 1.0
      %v533 = vadd.f32 %v531, 1.0
      %v534 = vrcp.pop %v532
      %v535 = vmul.f32 %v532, %v534
      %v536 = vsub.f32 1.0, %v535
      %v537 = vmul.f32 %v534, %v536
      %v538 = vadd.f32 %v534, %v537
      %vm539 = vweird.f32 %v532
      %vm540 = vweird.f32 %v534
      %vm541 = vmor %vm539, %vm540
      %v542 = vsel %vm541, %v534, %v538
      %v543 = vand.u32 2147483647, %v532
      %vm544 = vcmp.eq.f32.partialorder %v543, 8.507059e+37
      %v545 = vand.u32 %v532, 2147483648
      %v546 = vor.u32 1.1754944e-38, %v545
      %v547 = vsel %vm544, %v546, %v542
      %v548 = vmul.f32 1.0, %v547
      %v549 = vrcp.pop %v533
      %v550 = vmul.f32 %v533, %v549
      %v551 = vsub.f32 1.0, %v550
      %v552 = vmul.f32 %v549, %v551
      %v553 = vadd.f32 %v549, %v552
      %vm554 = vweird.f32 %v533
      %vm555 = vweird.f32 %v549
      %vm556 = vmor %vm554, %vm555
      %v557 = vsel %vm556, %v549, %v553
      %v558 = vand.u32 2147483647, %v533
      %vm559 = vcmp.eq.f32.partialorder %v558, 8.507059e+37
      %v560 = vand.u32 %v533, 2147483648
      %v561 = vor.u32 1.1754944e-38, %v560
      %v562 = vsel %vm559, %v561, %v557
      %v563 = vmul.f32 1.0, %v562
      %v564 = vmul.f32 %v520, %v548
      %v565 = vmul.f32 %v521, %v563
      %v566 = vxor.u32 %v522, 2147483648
      %v567 = vxor.u32 %v523, 2147483648
      %v568 = vmul.f32 %v566, 1.442695
      %v569 = vpow.pop %v568
      %v570 = vmul.f32 %v567, 1.442695
      %v571 = vpow.pop %v570
      %v572 = vadd.f32 %v569, 1.0
      %v573 = vadd.f32 %v571, 1.0
      %v574 = vrcp.pop %v572
      %v575 = vmul.f32 %v572, %v574
      %v576 = vsub.f32 1.0, %v575
      %v577 = vmul.f32 %v574, %v576
      %v578 = vadd.f32 %v574, %v577
      %vm579 = vweird.f32 %v572
      %vm580 = vweird.f32 %v574
      %vm581 = vmor %vm579, %vm580
      %v582 = vsel %vm581, %v574, %v578
      %v583 = vand.u32 2147483647, %v572
      %vm584 = vcmp.eq.f32.partialorder %v583, 8.507059e+37
      %v585 = vand.u32 %v572, 2147483648
      %v586 = vor.u32 1.1754944e-38, %v585
      %v587 = vsel %vm584, %v586, %v582
      %v588 = vmul.f32 1.0, %v587
      %v589 = vrcp.pop %v573
      %v590 = vmul.f32 %v573, %v589
      %v591 = vsub.f32 1.0, %v590
      %v592 = vmul.f32 %v589, %v591
      %v593 = vadd.f32 %v589, %v592
      %vm594 = vweird.f32 %v573
      %vm595 = vweird.f32 %v589
      %vm596 = vmor %vm594, %vm595
      %v597 = vsel %vm596, %v589, %v593
      %v598 = vand.u32 2147483647, %v573
      %vm599 = vcmp.eq.f32.partialorder %v598, 8.507059e+37
      %v600 = vand.u32 %v573, 2147483648
      %v601 = vor.u32 1.1754944e-38, %v600
      %v602 = vsel %vm599, %v601, %v597
      %v603 = vmul.f32 1.0, %v602
      %v604 = vmul.f32 %v522, %v588
      %v605 = vmul.f32 %v523, %v603
      %v606 = vsub.f32 %v604, %v564
      %v607 = vsub.f32 %v605, %v565
      %v608 = vxor.u32 %v524, 2147483648
      %v609 = vxor.u32 %v525, 2147483648
      %v610 = vmul.f32 %v608, 1.442695
      %v611 = vpow.pop %v610
      %v612 = vmul.f32 %v609, 1.442695
      %v613 = vpow.pop %v612
      %v614 = vadd.f32 %v611, 1.0
      %v615 = vadd.f32 %v613, 1.0
      %v616 = vrcp.pop %v614
      %v617 = vmul.f32 %v614, %v616
      %v618 = vsub.f32 1.0, %v617
      %v619 = vmul.f32 %v616, %v618
      %v620 = vadd.f32 %v616, %v619
      %vm621 = vweird.f32 %v614
      %vm622 = vweird.f32 %v616
      %vm623 = vmor %vm621, %vm622
      %v624 = vsel %vm623, %v616, %v620
      %v625 = vand.u32 2147483647, %v614
      %vm626 = vcmp.eq.f32.partialorder %v625, 8.507059e+37
      %v627 = vand.u32 %v614, 2147483648
      %v628 = vor.u32 1.1754944e-38, %v627
      %v629 = vsel %vm626, %v628, %v624
      %v630 = vmul.f32 1.0, %v629
      %v631 = vrcp.pop %v615
      %v632 = vmul.f32 %v615, %v631
      %v633 = vsub.f32 1.0, %v632
      %v634 = vmul.f32 %v631, %v633
      %v635 = vadd.f32 %v631, %v634
      %vm636 = vweird.f32 %v615
      %vm637 = vweird.f32 %v631
      %vm638 = vmor %vm636, %vm637
      %v639 = vsel %vm638, %v631, %v635
      %v640 = vand.u32 2147483647, %v615
      %vm641 = vcmp.eq.f32.partialorder %v640, 8.507059e+37
      %v642 = vand.u32 %v615, 2147483648
      %v643 = vor.u32 1.1754944e-38, %v642
      %v644 = vsel %vm641, %v643, %v639
      %v645 = vmul.f32 1.0, %v644
      %v646 = vmul.f32 %v524, %v630
      %v647 = vmul.f32 %v525, %v645
      %v648 = vsub.f32 %v646, %v564
      %v649 = vsub.f32 %v647, %v565
      %v650 = vld [vmem:[#allocation5] sm:$0xff]
      %v651 = vmul.f32 %v606, %v606
      %v652 = vmul.f32 %v607, %v607
      %v653 = vadd.f32 %v651, %v652
      %654 = vadd.xlane.f32.xlu0 %v653
      %v655 = vpop.xlane.xlu0 %654
      %v656 = vadd.f32 %v650, %v655
      %vm657 = vcmask 7168
      %658 = vst.msk [vmem:[#allocation5] sm:$0xff] %vm657, %v656
      %v659 = vld [vmem:[#allocation6] sm:$0xff]
      %v660 = vmul.f32 %v648, %v648
      %v661 = vmul.f32 %v649, %v649
      %v662 = vadd.f32 %v660, %v661
      %663 = vadd.xlane.f32.xlu0 %v662
      %v664 = vpop.xlane.xlu0 %663
      %v665 = vadd.f32 %v659, %v664
      %666 = vst.msk [vmem:[#allocation6] sm:$0xff] %vm657, %v665
      %667 = vst [vmem:[#allocation12] sm:$0xff] %v520
      %668 = vst [vmem:[#allocation12 + $0x8] sm:$0xff] %v521
      %s669 = scalar_lea.vmem [#allocation12], 16
      %670 = vst [vmem:[%s669] sm:$0xff] %v522
      %671 = vst [vmem:[%s669 + $0x8] sm:$0xff] %v523
      %s672 = scalar_lea.vmem [#allocation12], 32
      %673 = vst [vmem:[%s672] sm:$0xff] %v524
      %674 = vst [vmem:[%s672 + $0x8] sm:$0xff] %v525
    $region29: #{tpu_custom_call.1} parent=1 // pred_fallthru
      _
    // Predicated region
    $region30: #{tpu_custom_call.1} parent=1 // pred_check
      _
    $region31: #{tpu_custom_call.1} parent=1 // pred_check_branch
      %676 = sbr.rel (%p56) target = $region33
    $region32: #{tpu_custom_call.1} parent=1 // pred_region
      %v677 = vlaneseq
      %v678 = vand.u32 %v677, 127
      %v679 = vld [vmem:[#allocation5] sm:$0xff]
      %v680 = vrsqrt.pop %v679
      %v681 = vmul.f32 %v680, %v679
      %v682 = vmul.f32 %v681, %v680
      %v683 = vmul.f32 0.5, %v682
      %v684 = vsub.f32 1.5, %v683
      %v685 = vmul.f32 %v680, %v684
      %v686 = vmul.f32 %v679, %v685
      %vm687 = vcmp.eq.f32.partialorder %v679, inf
      %v688 = vsel %vm687, %v679, %v686
      %vm689 = vcmp.eq.f32.partialorder %v679, 0.0
      %v690 = vand.u32 %v679, 2147483648
      %v691 = vsel %vm689, %v690, %v688
      %v692 = vld [vmem:[#allocation6] sm:$0xff]
      %v693 = vrsqrt.pop %v692
      %v694 = vmul.f32 %v693, %v692
      %v695 = vmul.f32 %v694, %v693
      %v696 = vmul.f32 0.5, %v695
      %v697 = vsub.f32 1.5, %v696
      %v698 = vmul.f32 %v693, %v697
      %v699 = vmul.f32 %v692, %v698
      %vm700 = vcmp.eq.f32.partialorder %v692, inf
      %v701 = vsel %vm700, %v692, %v699
      %vm702 = vcmp.eq.f32.partialorder %v692, 0.0
      %v703 = vand.u32 %v692, 2147483648
      %v704 = vsel %vm702, %v703, %v701
      %vm705 = vcmp.eq.s32.totalorder %v678, 0
      %vm706 = vcmp.eq.s32.totalorder %v678, 1
      %708 = vset.pattern.permute.xlu0 0
      %709 = vperm.xlu0 %708, %v704
      %v710 = vpop.permute.xlu0 %709
      %v712 = vsel %vm706, %v710, 0.0
      %714 = vset.pattern.permute.xlu0 0
      %715 = vperm.xlu0 %714, %v691
      %v716 = vpop.permute.xlu0 %715
      %v718 = vsel %vm705, %v716, %v712
      %719 = vst [vmem:[#allocation13] sm:$0xff] %v718
    $region33: #{tpu_custom_call.1} parent=1 // pred_fallthru
      _
    // Predicated region
    $region34: #{tpu_custom_call.1} parent=1 // pred_check
      _
    $region35: #{tpu_custom_call.1} parent=1 // pred_check_branch
      %721 = sbr.rel (0) target = $region37
    $region36: #{tpu_custom_call.1} parent=1 // pred_region
      %723 = vsyncadd [#allocation9], 0
      %s724 = sshll.u32 [#allocation12], 4
      %s725 = int_to_ptr.vmem [resolvable:$true] %s724
      %s726 = sshll.u32 %s2, 4
      %s727 = int_to_ptr.hbm [resolvable:$true] %s726
      %732 = dma.vmem_to_hbm [thread:$0]  %s725, 768, %s727, [#allocation9], 256, 256, 16
    $region37: #{tpu_custom_call.1} parent=1 // pred_fallthru
      _
    // Predicated region
    $region38: #{tpu_custom_call.1} parent=1 // pred_check
      _
    $region39: #{tpu_custom_call.1} parent=1 // pred_check_branch
      %734 = sbr.rel (0) target = $region41
    $region40: #{tpu_custom_call.1} parent=1 // pred_region
      %736 = vsyncadd [#allocation14], 0
      %s738 = sshll.u32 [#allocation13], 4
      %s739 = int_to_ptr.vmem [resolvable:$true] %s738
      %s740 = sshll.u32 %s3, 4
      %s741 = int_to_ptr.hbm [resolvable:$true] %s740
      %743 = dma.vmem_to_hbm [thread:$0]  %s739, 128, %s741, [#allocation14]
    $region41: #{tpu_custom_call.1} parent=1 // pred_fallthru
      _
    // Predicated region
    $region42: #{tpu_custom_call.1} parent=1 // pred_check
      _
    $region43: #{tpu_custom_call.1} parent=1 // pred_check_branch
      %745 = sbr.rel (0) target = $region45
    $region44: #{tpu_custom_call.1} parent=1 // pred_region
      %747 = dma.done [#allocation9], 768
    $region45: #{tpu_custom_call.1} parent=1 // pred_fallthru
      _
    // Predicated region
    $region46: #{tpu_custom_call.1} parent=1 // pred_check
      _
    $region47: #{tpu_custom_call.1} parent=1 // pred_check_branch
      %749 = sbr.rel (0) target = $region49
    $region48: #{tpu_custom_call.1} parent=1 // pred_region
      %751 = dma.done [#allocation14], 128
    $region49: #{tpu_custom_call.1} parent=1 // pred_fallthru
      _
    %752 = vsyncpa [#allocation8], 1
    %753 = vsyncpa [#allocation11], 1
    %754 = vsyncpa [#allocation9], 1
    %755 = vsyncpa [#allocation14], 1

</llo_original>
